<compile_context>
chip_gen: v5e
topology: v5e:2x2
jax: 0.10.0
libtpu: 0.0.40
codegen_flags: <defaults>
</compile_context>

<pallas_src>
import functools

import jax
import jax.numpy as jnp
from jax.experimental import pallas as pl
from jax.experimental.pallas import tpu as pltpu

_LANE = 128


def _tiny_model_kernel(x_ref, w_ref, o_ref, *, quantize: bool):
    # x_ref: [IN, T] VMEM block (batch on lanes)
    # w_ref: [OUT, IN] SMEM (scalar reads)
    # o_ref: [OUT, T] VMEM block (lane-dense output)
    in_f = x_ref.shape[0]
    out_f = o_ref.shape[0]

    acc = [None] * out_f
    for k in range(in_f):
        xk = x_ref[k:k + 1, :]                     # [1, T] row, full lane width
        for o in range(out_f):
            term = w_ref[o, k] * xk                # scalar-broadcast VPU FMA
            acc[o] = term if acc[o] is None else acc[o] + term

    rows = []
    for o in range(out_f):
        y = jnp.maximum(acc[o], 0.0)               # ReLU
        if quantize:
            y = jnp.floor(y)                       # NeuromorphicReLU quantization
        rows.append(y)

    # One full-width, lane-dense store of the whole [OUT, T] tile.
    o_ref[...] = jnp.concatenate(rows, axis=0).astype(o_ref.dtype)


def tiny_model_forward(x: jax.Array, weight: jax.Array, quantize: bool = False,
                       tile_n: int = 8192):
    """x: [N, 5] float32, weight: [2, 5] float32 (PyTorch Linear layout)."""
    n, in_f = x.shape
    out_f = weight.shape[0]

    # Pad batch up to a lane multiple, pick tile, pad batch up to tile multiple.
    n_lane = max(_LANE, pl.cdiv(n, _LANE) * _LANE)
    tile = min(tile_n, n_lane)                      # tile is a multiple of 128
    n_total = pl.cdiv(n_lane, tile) * tile
    grid_n = n_total // tile

    # Glue layout work in the wrapper: batch on lanes, zero-padded remainder.
    x_pad = jnp.pad(x.astype(jnp.float32), ((0, n_total - n), (0, 0)))
    x_t = x_pad.T                                   # [IN, N_total]

    kernel = functools.partial(_tiny_model_kernel, quantize=quantize)

    out_t = pl.pallas_call(
        kernel,
        out_shape=jax.ShapeDtypeStruct((out_f, n_total), jnp.float32),
        grid=(grid_n,),
        in_specs=[
            pl.BlockSpec((in_f, tile), lambda i: (0, i)),
            pl.BlockSpec(memory_space=pltpu.MemorySpace.SMEM),   # 10 weight scalars
        ],
        out_specs=pl.BlockSpec((out_f, tile), lambda i: (0, i)),
        compiler_params=pltpu.CompilerParams(
            dimension_semantics=("parallel",),
        ),
    )(x_t, weight.astype(jnp.float32))

    # Trim padding and transpose back to the PyTorch [N, OUT] layout.
    return out_t[:, :n].T


if __name__ == "__main__":
    # Deterministic weights exactly as in TinyModel.__init__
    weight = jnp.array(
        [[1.2, 1.0, 1.0, 3.0, -2.0],
         [1.2, 1.0, 1.0, 2.0, -10.0]],
        dtype=jnp.float32,
    )

    # Small deterministic input: batch=8, in_features=5
    key = jax.random.PRNGKey(0)
    x = jax.random.normal(key, (8, 5), dtype=jnp.float32)

    # quantize=False branch of TinyModel(quantize)
    out = jax.block_until_ready(tiny_model_forward(x, weight, quantize=False))
    ref = jnp.maximum(x @ weight.T, 0.0)
    assert out.shape == (8, 2)
    assert jnp.allclose(out, ref, atol=1e-5), "mismatch vs reference"

    # quantize=True branch as well
    out_q = jax.block_until_ready(tiny_model_forward(x, weight, quantize=True))
    ref_q = jnp.floor(jnp.maximum(x @ weight.T, 0.0))
    assert jnp.allclose(out_q, ref_q, atol=1e-5), "quantized mismatch vs reference"

    print("KERNEL_OK")
</pallas_src>

<mosaic_0001>
module attributes {stable_mosaic.version = 11 : i64} {
  func.func @_tiny_model_kernel(%arg0: i32, %arg1: memref<5x128xf32, #tpu.memory_space<vmem>>, %arg2: memref<2x5xf32, #tpu.memory_space<smem>>, %arg3: memref<2x128xf32, #tpu.memory_space<vmem>>) attributes {dimension_semantics = [#tpu.dimension_semantics<parallel>], iteration_bounds = array<i64: 1>, scalar_prefetch = 0 : i64, scratch_operands = 0 : i64, tpu.core_type = #tpu.core_type<tc>, window_params = [{transform_indices = @transform_0, window_bounds = array<i64: 5, 128>}, {transform_indices = @transform_1, window_bounds = array<i64: 2, 5>}, {transform_indices = @transform_2, window_bounds = array<i64: 2, 128>}]} {
    %c0 = arith.constant 0 : index
    %c0_0 = arith.constant 0 : index
    %0 = vector.load %arg1[%c0, %c0_0] : memref<5x128xf32, #tpu.memory_space<vmem>>, vector<1x128xf32>
    %c0_1 = arith.constant 0 : index
    %c0_2 = arith.constant 0 : index
    %1 = memref.load %arg2[%c0_1, %c0_2] : memref<2x5xf32, #tpu.memory_space<smem>>
    %2 = vector.broadcast %1 : f32 to vector<1x128xf32>
    %3 = arith.mulf %2, %0 : vector<1x128xf32>
    %c1 = arith.constant 1 : index
    %c0_3 = arith.constant 0 : index
    %4 = memref.load %arg2[%c1, %c0_3] : memref<2x5xf32, #tpu.memory_space<smem>>
    %5 = vector.broadcast %4 : f32 to vector<1x128xf32>
    %6 = arith.mulf %5, %0 : vector<1x128xf32>
    %c1_4 = arith.constant 1 : index
    %c0_5 = arith.constant 0 : index
    %7 = vector.load %arg1[%c1_4, %c0_5] : memref<5x128xf32, #tpu.memory_space<vmem>>, vector<1x128xf32>
    %c0_6 = arith.constant 0 : index
    %c1_7 = arith.constant 1 : index
    %8 = memref.load %arg2[%c0_6, %c1_7] : memref<2x5xf32, #tpu.memory_space<smem>>
    %9 = vector.broadcast %8 : f32 to vector<1x128xf32>
    %10 = arith.mulf %9, %7 : vector<1x128xf32>
    %11 = arith.addf %3, %10 : vector<1x128xf32>
    %c1_8 = arith.constant 1 : index
    %c1_9 = arith.constant 1 : index
    %12 = memref.load %arg2[%c1_8, %c1_9] : memref<2x5xf32, #tpu.memory_space<smem>>
    %13 = vector.broadcast %12 : f32 to vector<1x128xf32>
    %14 = arith.mulf %13, %7 : vector<1x128xf32>
    %15 = arith.addf %6, %14 : vector<1x128xf32>
    %c2 = arith.constant 2 : index
    %c0_10 = arith.constant 0 : index
    %16 = vector.load %arg1[%c2, %c0_10] : memref<5x128xf32, #tpu.memory_space<vmem>>, vector<1x128xf32>
    %c0_11 = arith.constant 0 : index
    %c2_12 = arith.constant 2 : index
    %17 = memref.load %arg2[%c0_11, %c2_12] : memref<2x5xf32, #tpu.memory_space<smem>>
    %18 = vector.broadcast %17 : f32 to vector<1x128xf32>
    %19 = arith.mulf %18, %16 : vector<1x128xf32>
    %20 = arith.addf %11, %19 : vector<1x128xf32>
    %c1_13 = arith.constant 1 : index
    %c2_14 = arith.constant 2 : index
    %21 = memref.load %arg2[%c1_13, %c2_14] : memref<2x5xf32, #tpu.memory_space<smem>>
    %22 = vector.broadcast %21 : f32 to vector<1x128xf32>
    %23 = arith.mulf %22, %16 : vector<1x128xf32>
    %24 = arith.addf %15, %23 : vector<1x128xf32>
    %c3 = arith.constant 3 : index
    %c0_15 = arith.constant 0 : index
    %25 = vector.load %arg1[%c3, %c0_15] : memref<5x128xf32, #tpu.memory_space<vmem>>, vector<1x128xf32>
    %c0_16 = arith.constant 0 : index
    %c3_17 = arith.constant 3 : index
    %26 = memref.load %arg2[%c0_16, %c3_17] : memref<2x5xf32, #tpu.memory_space<smem>>
    %27 = vector.broadcast %26 : f32 to vector<1x128xf32>
    %28 = arith.mulf %27, %25 : vector<1x128xf32>
    %29 = arith.addf %20, %28 : vector<1x128xf32>
    %c1_18 = arith.constant 1 : index
    %c3_19 = arith.constant 3 : index
    %30 = memref.load %arg2[%c1_18, %c3_19] : memref<2x5xf32, #tpu.memory_space<smem>>
    %31 = vector.broadcast %30 : f32 to vector<1x128xf32>
    %32 = arith.mulf %31, %25 : vector<1x128xf32>
    %33 = arith.addf %24, %32 : vector<1x128xf32>
    %c4 = arith.constant 4 : index
    %c0_20 = arith.constant 0 : index
    %34 = vector.load %arg1[%c4, %c0_20] : memref<5x128xf32, #tpu.memory_space<vmem>>, vector<1x128xf32>
    %c0_21 = arith.constant 0 : index
    %c4_22 = arith.constant 4 : index
    %35 = memref.load %arg2[%c0_21, %c4_22] : memref<2x5xf32, #tpu.memory_space<smem>>
    %36 = vector.broadcast %35 : f32 to vector<1x128xf32>
    %37 = arith.mulf %36, %34 : vector<1x128xf32>
    %38 = arith.addf %29, %37 : vector<1x128xf32>
    %c1_23 = arith.constant 1 : index
    %c4_24 = arith.constant 4 : index
    %39 = memref.load %arg2[%c1_23, %c4_24] : memref<2x5xf32, #tpu.memory_space<smem>>
    %40 = vector.broadcast %39 : f32 to vector<1x128xf32>
    %41 = arith.mulf %40, %34 : vector<1x128xf32>
    %42 = arith.addf %33, %41 : vector<1x128xf32>
    %cst = arith.constant 0.000000e+00 : f32
    %43 = vector.broadcast %cst : f32 to vector<1x128xf32>
    %44 = arith.maximumf %38, %43 : vector<1x128xf32>
    %cst_25 = arith.constant 0.000000e+00 : f32
    %45 = vector.broadcast %cst_25 : f32 to vector<1x128xf32>
    %46 = arith.maximumf %42, %45 : vector<1x128xf32>
    %47 = tpu.concatenate %44, %46 in 0 : vector<1x128xf32>, vector<1x128xf32> -> vector<2x128xf32>
    %c0_26 = arith.constant 0 : index
    %c0_27 = arith.constant 0 : index
    %48 = vector.load %arg3[%c0_26, %c0_27] : memref<2x128xf32, #tpu.memory_space<vmem>>, vector<2x128xf32>
    tpu.vector_store %arg3[%c0_26, %c0_27], %47 {strides = array<i32>} : memref<2x128xf32, #tpu.memory_space<vmem>>, vector<2x128xf32>,
    return
  }
  func.func @transform_0(%arg0: i32) -> (i32, i32) {
    %c0_i32 = arith.constant 0 : i32
    %c0_i32_0 = arith.constant 0 : i32
    return %c0_i32, %arg0 : i32, i32
  }
  func.func @transform_1(%arg0: i32) -> (i32, i32) {
    %c0_i32 = arith.constant 0 : i32
    %c0_i32_0 = arith.constant 0 : i32
    %c0_i32_1 = arith.constant 0 : i32
    return %c0_i32, %c0_i32_0 : i32, i32
  }
  func.func @transform_2(%arg0: i32) -> (i32, i32) {
    %c0_i32 = arith.constant 0 : i32
    %c0_i32_0 = arith.constant 0 : i32
    return %c0_i32, %arg0 : i32, i32
  }
}

</mosaic_0001>

<llo_original>
// kernel: tpu_custom_call.1
$region0: #{tpu_custom_call.1}
  #allocation0 [shape = 'u32[]', space=smem, size = 0x4, offset = 0x4, fixed_abs, tag = 'smem constant byte address 0x4 - core index']
  #allocation1 [shape = 'u32[72,128]{1,0:T(1,128)}', space=vmem, size = 0x9000, scoped, tag = 'internal scratch']
  %s0 = inlined_call_operand.hbm [shape: f32[5,128], index: 0, kind: input, shape index: {}]
  %s1 = inlined_call_operand.hbm [shape: f32[2,5], index: 1, kind: input, shape index: {}]
  %s2 = inlined_call_operand.hbm [shape: f32[2,128], index: 2, kind: output, shape index: {}]
  %s3 = sld [smem:[#allocation0]]
  $region26: #{tpu_custom_call.1} parent=0
    _
  %s5 = ssub.s32 1, %s3
  %s6 = scalar_select 0, %s5, %s3
  $region1: #{tpu_custom_call.1} parent=0
    #allocation2 [shape = 'u8[4096]{0}', space=vmem, size = 0x1000, scoped, tag = 'input window, operand 0, single buffered']
    #allocation3 [shape = 's32[1]{0}', space=sflag, size = 0x4, scoped, tag = 'scoped memory for tpu_custom_call.1']
    #allocation4 [shape = 's32[1]{0}', space=sflag, size = 0x4, scoped, tag = 'scoped memory for tpu_custom_call.1']
    #allocation5 [shape = 's32[1]{0}', space=sflag, size = 0x4, scoped, tag = 'scoped memory for tpu_custom_call.1']
    #allocation6 [shape = 'u8[1024]{0}', space=smem, size = 0x400, scoped, tag = 'input window, operand 1, single buffered']
    #allocation7 [shape = 'u8[1024]{0}', space=vmem, size = 0x400, scoped, tag = 'output window, operand 0, single buffered']
    %7 = vsyncpa [#allocation3], 0
    %8 = vsyncpa [#allocation5], 0
    %9 = vsyncpa [#allocation4], 0
    // Predicated region
    $region2: #{tpu_custom_call.1} parent=1 // pred_check
      _
    $region3: #{tpu_custom_call.1} parent=1 // pred_check_branch
      %11 = sbr.rel (0) target = $region5
    $region4: #{tpu_custom_call.1} parent=1 // pred_region
      %13 = vsyncadd [#allocation3], 0
      %s15 = sshll.u32 %s0, 4
      %s16 = int_to_ptr.hbm [resolvable:$true] %s15
      %s17 = sshll.u32 [#allocation2], 4
      %s18 = int_to_ptr.vmem [resolvable:$true] %s17
      %20 = dma.hbm_to_vmem [thread:$0]  %s16, 128, %s18, [#allocation3]
    $region5: #{tpu_custom_call.1} parent=1 // pred_fallthru
      _
    // Predicated region
    $region6: #{tpu_custom_call.1} parent=1 // pred_check
      _
    $region7: #{tpu_custom_call.1} parent=1 // pred_check_branch
      %22 = sbr.rel (0) target = $region9
    $region8: #{tpu_custom_call.1} parent=1 // pred_region
      %24 = vsyncadd [#allocation5], 0
      %s26 = sshll.u32 %s1, 4
      %s27 = int_to_ptr.hbm [resolvable:$true] %s26
      %29 = dma.hbm_to_smem %s27, 32, [#allocation6], [#allocation5]
    $region9: #{tpu_custom_call.1} parent=1 // pred_fallthru
      _
    // Predicated region
    $region10: #{tpu_custom_call.1} parent=1 // pred_check
      _
    $region11: #{tpu_custom_call.1} parent=1 // pred_check_branch
      %31 = sbr.rel (0) target = $region13
    $region12: #{tpu_custom_call.1} parent=1 // pred_region
      %33 = dma.done [#allocation3], 128
    $region13: #{tpu_custom_call.1} parent=1 // pred_fallthru
      _
    // Predicated region
    $region14: #{tpu_custom_call.1} parent=1 // pred_check
      _
    $region15: #{tpu_custom_call.1} parent=1 // pred_check_branch
      %35 = sbr.rel (0) target = $region17
    $region16: #{tpu_custom_call.1} parent=1 // pred_region
      %37 = dma.done [#allocation5], 32
    $region17: #{tpu_custom_call.1} parent=1 // pred_fallthru
      _
    %38 = sfence
    %v39 = vld [vmem:[#allocation2] sm:$0x1]
    %s40 = sld [smem:[#allocation6]]
    %v41 = vstv %s40
    %v42 = vmul.f32 %v41, %v39
    %s43 = sld [smem:[#allocation6 + $0x80]]
    %v44 = vstv %s43
    %v45 = vmul.f32 %v44, %v39
    %v46 = vld [vmem:[#allocation2 + $0x1] sm:$0x1]
    %s47 = sld [smem:[#allocation6 + $0x1]]
    %v48 = vstv %s47
    %v49 = vmul.f32 %v48, %v46
    %v50 = vadd.f32 %v42, %v49
    %s51 = sld [smem:[#allocation6 + $0x81]]
    %v52 = vstv %s51
    %v53 = vmul.f32 %v52, %v46
    %v54 = vadd.f32 %v45, %v53
    %v55 = vld [vmem:[#allocation2 + $0x2] sm:$0x1]
    %s56 = sld [smem:[#allocation6 + $0x2]]
    %v57 = vstv %s56
    %v58 = vmul.f32 %v57, %v55
    %v59 = vadd.f32 %v50, %v58
    %s60 = sld [smem:[#allocation6 + $0x82]]
    %v61 = vstv %s60
    %v62 = vmul.f32 %v61, %v55
    %v63 = vadd.f32 %v54, %v62
    %v64 = vld [vmem:[#allocation2 + $0x3] sm:$0x1]
    %s65 = sld [smem:[#allocation6 + $0x3]]
    %v66 = vstv %s65
    %v67 = vmul.f32 %v66, %v64
    %v68 = vadd.f32 %v59, %v67
    %s69 = sld [smem:[#allocation6 + $0x83]]
    %v70 = vstv %s69
    %v71 = vmul.f32 %v70, %v64
    %v72 = vadd.f32 %v63, %v71
    %v73 = vld [vmem:[#allocation2 + $0x4] sm:$0x1]
    %s74 = sld [smem:[#allocation6 + $0x4]]
    %v75 = vstv %s74
    %v76 = vmul.f32 %v75, %v73
    %v77 = vadd.f32 %v68, %v76
    %s78 = sld [smem:[#allocation6 + $0x84]]
    %v79 = vstv %s78
    %v80 = vmul.f32 %v79, %v73
    %v81 = vadd.f32 %v72, %v80
    %v82 = vmax.f32 %v77, 0.0
    %v83 = vmax.f32 %v81, 0.0
    %v85 = vrot.slane %v83, 7
    %vm87 = vcmask 1040384
    %v88 = vsel %vm87, %v82, %v85
    %89 = vst [vmem:[#allocation7] sm:$0x3] %v88
    // Predicated region
    $region18: #{tpu_custom_call.1} parent=1 // pred_check
      _
    $region19: #{tpu_custom_call.1} parent=1 // pred_check_branch
      %91 = sbr.rel (0) target = $region21
    $region20: #{tpu_custom_call.1} parent=1 // pred_region
      %93 = vsyncadd [#allocation4], 0
      %s95 = sshll.u32 [#allocation7], 4
      %s96 = int_to_ptr.vmem [resolvable:$true] %s95
      %s97 = sshll.u32 %s2, 4
      %s98 = int_to_ptr.hbm [resolvable:$true] %s97
      %100 = dma.vmem_to_hbm [thread:$0]  %s96, 32, %s98, [#allocation4]
    $region21: #{tpu_custom_call.1} parent=1 // pred_fallthru
      _
    // Predicated region
    $region22: #{tpu_custom_call.1} parent=1 // pred_check
      _
    $region23: #{tpu_custom_call.1} parent=1 // pred_check_branch
      %102 = sbr.rel (0) target = $region25
    $region24: #{tpu_custom_call.1} parent=1 // pred_region
      %104 = dma.done [#allocation4], 32
    $region25: #{tpu_custom_call.1} parent=1 // pred_fallthru
      _
    %105 = vsyncpa [#allocation3], 1
    %106 = vsyncpa [#allocation4], 1
    %107 = vsyncpa [#allocation5], 1

</llo_original>
